<compile_context>
chip_gen: v6e
topology: v6e:2x2x1
jax: 0.10.0
libtpu: 0.0.40
codegen_flags: <defaults>
</compile_context>

<pallas_src>
import functools

import jax
import jax.numpy as jnp
from jax.experimental import pallas as pl
from jax.experimental.pallas import tpu as pltpu


# ----------------------------------------------------------------------------
# Kernel.  grid = (batch tiles, output-column tiles of W).
#   x_ref : (Bt, S, D)      (constant over the column axis -> DMA'd once)
#   w_ref : (D, tn)         (resident: constant over the batch axis)
#   b_ref : (1, tn)
#   o_ref : (Bt, S, tn)
#   xs_ref: (Bt, S, D)      VMEM scratch holding shift(x) for the batch tile
# ----------------------------------------------------------------------------
def _fused_shift_linear_kernel(n_tokens, dim_chunk,
                               x_ref, w_ref, b_ref, o_ref, xs_ref):
    N = n_tokens
    c = dim_chunk
    Bt, S, D = x_ref.shape

    # Token shift is independent of the W column tile: compute it once per
    # batch tile (j == 0) into VMEM scratch and reuse for every column tile.
    @pl.when(pl.program_id(1) == 0)
    def _():
        # Thin iotas; compares/selects broadcast them lazily.
        row = jax.lax.broadcasted_iota(jnp.int32, (S, 1), 0)
        col = jax.lax.broadcasted_iota(jnp.int32, (1, D), 1)
        is_tok = row >= 1                                  # cls row passes through
        use_nxt = is_tok & (col < c)                       # chunk 0: shift(-1)
        use_prv = is_tok & (col >= 2 * c) & (col < 3 * c)  # chunk 2: shift(+1)
        for i in range(Bt):                                # static unroll
            xi = x_ref[i]                                  # (S, D)
            # nxt[s] = x[s+N] for s <= S-1-N, 0 otherwise (zeros are splats).
            nxt = jnp.concatenate(
                [xi[N:, :], jnp.zeros((N, D), dtype=xi.dtype)], axis=0)
            # prv[s] = x[s-N] for s >= N+1, 0 otherwise.
            prv = jnp.concatenate(
                [jnp.zeros((N + 1, D), dtype=xi.dtype), xi[1:S - N, :]], axis=0)
            xs_ref[i] = jnp.where(use_nxt, nxt, jnp.where(use_prv, prv, xi))

    # Fused Linear on the current W column tile.  Per-batch-element 2-D dots:
    # avoids an unaligned (Bt,S,D)->(Bt*S,D) relayout (S = 1+F*N is never a
    # multiple of 8); at production S the MXU M-dim is already large.
    w = w_ref[...]
    bias = b_ref[...].astype(jnp.float32)
    for i in range(Bt):                                    # static unroll
        acc = jnp.dot(xs_ref[i], w, preferred_element_type=jnp.float32)
        o_ref[i] = (acc + bias).astype(o_ref.dtype)


# ----------------------------------------------------------------------------
# Wrapper: tiling / VMEM-budget selection per TPU generation.
# ----------------------------------------------------------------------------
def _default_vmem_limit_bytes():
    try:
        kind = jax.devices()[0].device_kind.lower()
    except Exception:  # pragma: no cover - defensive
        kind = ""
    if ("v7" in kind) or ("7x" in kind) or ("ironwood" in kind):
        return 48 * 1024 * 1024        # v7x: 64 MiB physical per core
    if any(tag in kind for tag in ("v4", "v5", "v6")):
        return 96 * 1024 * 1024        # 128 MiB physical: use the headroom
    return 32 * 1024 * 1024            # unknown: conservative


def _pick_out_tile(D):
    """Output-column tile of W: whole D when small, else a >=256 divisor."""
    if D <= 512:
        return D
    for t in (512, 384, 256):
        if D % t == 0:
            return t
    return D


def _pick_batch_tile(B, S, D, tn, itemsize, budget_bytes):
    """Largest divisor of B whose per-step VMEM footprint fits the budget."""
    def est(bt):
        x_blk = bt * S * D * itemsize
        out_blk = bt * S * tn * itemsize
        w_blk = D * tn * itemsize
        acc = S * tn * 4
        # 2x double-buffered x/out/W blocks + shift scratch + ~3 in-kernel
        # (S,D) temporaries (nxt/prv/select) + one f32 accumulator.
        return 2 * x_blk + 2 * out_blk + 2 * w_blk + x_blk + \
            3 * (S * D * itemsize) + acc

    bt = 1
    for cand in range(1, B + 1):
        if B % cand == 0 and est(cand) <= budget_bytes:
            bt = cand
    return bt


def pre_token_shift_forward(x, frames, w, b, *, vmem_limit_bytes=None):
    """x: (B, S, D) with S = 1 + frames*N;  w: (D, D);  b: (1, D)."""
    B, S, D = x.shape
    assert (S - 1) % frames == 0, "sequence (minus cls) must split into frames"
    assert D >= 3, "channel dim must allow three D//3 chunks"
    assert w.shape == (D, D) and b.shape == (1, D)
    N = (S - 1) // frames

    if vmem_limit_bytes is None:
        vmem_limit_bytes = _default_vmem_limit_bytes()
    tn = _pick_out_tile(D)                       # lane-dense (multiple of 128
    #                                              or full D) output tiles
    Bt = _pick_batch_tile(B, S, D, tn, x.dtype.itemsize,
                          budget_bytes=int(vmem_limit_bytes * 0.6))
    grid = (B // Bt, D // tn)

    kern = functools.partial(_fused_shift_linear_kernel, N, D // 3)
    return pl.pallas_call(
        kern,
        out_shape=jax.ShapeDtypeStruct((B, S, D), x.dtype),
        grid=grid,
        in_specs=[
            pl.BlockSpec((Bt, S, D), lambda bi, j: (bi, 0, 0)),   # x: once per bi
            pl.BlockSpec((D, tn), lambda bi, j: (0, j)),          # W column tile
            pl.BlockSpec((1, tn), lambda bi, j: (0, j)),          # bias tile
        ],
        out_specs=pl.BlockSpec((Bt, S, tn), lambda bi, j: (bi, 0, j)),
        scratch_shapes=[pltpu.VMEM((Bt, S, D), x.dtype)],          # shift(x)
        compiler_params=pltpu.CompilerParams(
            dimension_semantics=("parallel", "arbitrary"),
            vmem_limit_bytes=vmem_limit_bytes,
        ),
    )(x, w, b)


# ----------------------------------------------------------------------------
# Pure-JAX reference (mirrors the PyTorch forward exactly).
# ----------------------------------------------------------------------------
def ref_forward(x, frames, w, b):
    B, S, D = x.shape
    N = (S - 1) // frames
    cls_x = x[:, :1]
    t = x[:, 1:].reshape(B, frames, N, D)
    c = D // 3
    ch0, ch1, ch2, rest = (t[..., :c], t[..., c:2 * c],
                           t[..., 2 * c:3 * c], t[..., 3 * c:])
    # shift(amt=-1): out[f] = in[f+1], zero last frame
    sh0 = jnp.concatenate([ch0[:, 1:], jnp.zeros_like(ch0[:, :1])], axis=1)
    # shift(amt=+1): out[f] = in[f-1], zero first frame
    sh2 = jnp.concatenate([jnp.zeros_like(ch2[:, :1]), ch2[:, :-1]], axis=1)
    t2 = jnp.concatenate([sh0, ch1, sh2, rest], axis=-1)
    xf = jnp.concatenate([cls_x, t2.reshape(B, frames * N, D)], axis=1)
    return xf @ w + b


if __name__ == "__main__":
    # D=128 keeps every load/select/store lane-dense (128-lane vregs); chunks
    # are 42/42/42 with a 2-channel passthrough remainder.
    B, F, N, D = 2, 4, 8, 128
    S = 1 + F * N

    key = jax.random.PRNGKey(0)
    k1, k2, k3 = jax.random.split(key, 3)
    x = jax.random.normal(k1, (B, S, D), dtype=jnp.float32)
    w = jax.random.normal(k2, (D, D), dtype=jnp.float32) * 0.02
    b = jax.random.normal(k3, (1, D), dtype=jnp.float32) * 0.02

    out = pre_token_shift_forward(x, F, w, b)
    out = jax.block_until_ready(out)

    ref = ref_forward(x, F, w, b)
    assert out.shape == (B, S, D)
    assert jnp.allclose(out, ref, atol=1e-4, rtol=1e-4), "mismatch vs reference"
    print("KERNEL_OK")
</pallas_src>

<mosaic_0001>
module attributes {stable_mosaic.version = 11 : i64} {
  func.func @_fused_shift_linear_kernel(%arg0: i32, %arg1: i32, %arg2: memref<2x33x128xf32, #tpu.memory_space<vmem>>, %arg3: memref<128x128xf32, #tpu.memory_space<vmem>>, %arg4: memref<1x128xf32, #tpu.memory_space<vmem>>, %arg5: memref<2x33x128xf32, #tpu.memory_space<vmem>>, %arg6: memref<2x33x128xf32, #tpu.memory_space<vmem>>) attributes {dimension_semantics = [#tpu.dimension_semantics<parallel>, #tpu.dimension_semantics<arbitrary>], iteration_bounds = array<i64: 1, 1>, scalar_prefetch = 0 : i64, scratch_operands = 1 : i64, tpu.core_type = #tpu.core_type<tc>, window_params = [{transform_indices = @transform_0, window_bounds = array<i64: 2, 33, 128>}, {transform_indices = @transform_1, window_bounds = array<i64: 128, 128>}, {transform_indices = @transform_2, window_bounds = array<i64: 1, 128>}, {transform_indices = @transform_3, window_bounds = array<i64: 2, 33, 128>}]} {
    %c0_i32 = arith.constant 0 : i32
    %0 = arith.cmpi eq, %arg1, %c0_i32 : i32
    %1 = arith.extui %0 : i1 to i32
    %c0_i32_0 = arith.constant 0 : i32
    %2 = arith.cmpi ne, %1, %c0_i32_0 : i32
    scf.if %2 {
      %21 = tpu.iota {dimensions = array<i32: 0>} : vector<33x1xi32>
      %22 = tpu.iota {dimensions = array<i32: 1>} : vector<1x128xi32>
      %c1_i32 = arith.constant 1 : i32
      %23 = vector.broadcast %c1_i32 : i32 to vector<33x1xi32>
      %24 = arith.cmpi sge, %21, %23 : vector<33x1xi32>
      %c42_i32 = arith.constant 42 : i32
      %25 = vector.broadcast %c42_i32 : i32 to vector<1x128xi32>
      %26 = arith.cmpi slt, %22, %25 : vector<1x128xi32>
      %27 = vector.broadcast %24 : vector<33x1xi1> to vector<33x128xi1>
      %28 = vector.broadcast %26 : vector<1x128xi1> to vector<33x128xi1>
      %29 = arith.andi %27, %28 : vector<33x128xi1>
      %c84_i32 = arith.constant 84 : i32
      %30 = vector.broadcast %c84_i32 : i32 to vector<1x128xi32>
      %31 = arith.cmpi sge, %22, %30 : vector<1x128xi32>
      %32 = vector.broadcast %24 : vector<33x1xi1> to vector<33x128xi1>
      %33 = vector.broadcast %31 : vector<1x128xi1> to vector<33x128xi1>
      %34 = arith.andi %32, %33 : vector<33x128xi1>
      %c126_i32 = arith.constant 126 : i32
      %35 = vector.broadcast %c126_i32 : i32 to vector<1x128xi32>
      %36 = arith.cmpi slt, %22, %35 : vector<1x128xi32>
      %37 = vector.broadcast %36 : vector<1x128xi1> to vector<33x128xi1>
      %38 = arith.andi %34, %37 : vector<33x128xi1>
      %c0_16 = arith.constant 0 : index
      %c0_17 = arith.constant 0 : index
      %c0_18 = arith.constant 0 : index
      %39 = vector.load %arg2[%c0_16, %c0_17, %c0_18] : memref<2x33x128xf32, #tpu.memory_space<vmem>>, vector<1x33x128xf32>
      %40 = vector.shape_cast %39 : vector<1x33x128xf32> to vector<33x128xf32>
      %41 = vector.extract_strided_slice %40 {offsets = [8, 0], sizes = [25, 128], strides = [1, 1]} : vector<33x128xf32> to vector<25x128xf32>
      %cst_19 = arith.constant 0.000000e+00 : f32
      %42 = vector.broadcast %cst_19 : f32 to vector<8x128xf32>
      %43 = tpu.concatenate %41, %42 in 0 : vector<25x128xf32>, vector<8x128xf32> -> vector<33x128xf32>
      %cst_20 = arith.constant 0.000000e+00 : f32
      %44 = vector.broadcast %cst_20 : f32 to vector<9x128xf32>
      %45 = vector.extract_strided_slice %40 {offsets = [1, 0], sizes = [24, 128], strides = [1, 1]} : vector<33x128xf32> to vector<24x128xf32>
      %46 = tpu.concatenate %44, %45 in 0 : vector<9x128xf32>, vector<24x128xf32> -> vector<33x128xf32>
      %47 = arith.select %38, %46, %40 : vector<33x128xi1>, vector<33x128xf32>
      %48 = arith.select %29, %43, %47 : vector<33x128xi1>, vector<33x128xf32>
      %c0_21 = arith.constant 0 : index
      %c0_22 = arith.constant 0 : index
      %c0_23 = arith.constant 0 : index
      %49 = vector.load %arg6[%c0_21, %c0_22, %c0_23] : memref<2x33x128xf32, #tpu.memory_space<vmem>>, vector<1x33x128xf32>
      %50 = vector.shape_cast %49 : vector<1x33x128xf32> to vector<33x128xf32>
      %51 = vector.shape_cast %48 : vector<33x128xf32> to vector<1x33x128xf32>
      tpu.vector_store %arg6[%c0_21, %c0_22, %c0_23], %51 {strides = array<i32>} : memref<2x33x128xf32, #tpu.memory_space<vmem>>, vector<1x33x128xf32>,
      %c1_24 = arith.constant 1 : index
      %c0_25 = arith.constant 0 : index
      %c0_26 = arith.constant 0 : index
      %52 = vector.load %arg2[%c1_24, %c0_25, %c0_26] : memref<2x33x128xf32, #tpu.memory_space<vmem>>, vector<1x33x128xf32>
      %53 = vector.shape_cast %52 : vector<1x33x128xf32> to vector<33x128xf32>
      %54 = vector.extract_strided_slice %53 {offsets = [8, 0], sizes = [25, 128], strides = [1, 1]} : vector<33x128xf32> to vector<25x128xf32>
      %cst_27 = arith.constant 0.000000e+00 : f32
      %55 = vector.broadcast %cst_27 : f32 to vector<8x128xf32>
      %56 = tpu.concatenate %54, %55 in 0 : vector<25x128xf32>, vector<8x128xf32> -> vector<33x128xf32>
      %cst_28 = arith.constant 0.000000e+00 : f32
      %57 = vector.broadcast %cst_28 : f32 to vector<9x128xf32>
      %58 = vector.extract_strided_slice %53 {offsets = [1, 0], sizes = [24, 128], strides = [1, 1]} : vector<33x128xf32> to vector<24x128xf32>
      %59 = tpu.concatenate %57, %58 in 0 : vector<9x128xf32>, vector<24x128xf32> -> vector<33x128xf32>
      %60 = arith.select %38, %59, %53 : vector<33x128xi1>, vector<33x128xf32>
      %61 = arith.select %29, %56, %60 : vector<33x128xi1>, vector<33x128xf32>
      %c1_29 = arith.constant 1 : index
      %c0_30 = arith.constant 0 : index
      %c0_31 = arith.constant 0 : index
      %62 = vector.load %arg6[%c1_29, %c0_30, %c0_31] : memref<2x33x128xf32, #tpu.memory_space<vmem>>, vector<1x33x128xf32>
      %63 = vector.shape_cast %62 : vector<1x33x128xf32> to vector<33x128xf32>
      %64 = vector.shape_cast %61 : vector<33x128xf32> to vector<1x33x128xf32>
      tpu.vector_store %arg6[%c1_29, %c0_30, %c0_31], %64 {strides = array<i32>} : memref<2x33x128xf32, #tpu.memory_space<vmem>>, vector<1x33x128xf32>,
    } else {
    }
    %c0 = arith.constant 0 : index
    %c0_1 = arith.constant 0 : index
    %3 = vector.load %arg3[%c0, %c0_1] : memref<128x128xf32, #tpu.memory_space<vmem>>, vector<128x128xf32>
    %c0_2 = arith.constant 0 : index
    %c0_3 = arith.constant 0 : index
    %4 = vector.load %arg4[%c0_2, %c0_3] : memref<1x128xf32, #tpu.memory_space<vmem>>, vector<1x128xf32>
    %c0_4 = arith.constant 0 : index
    %c0_5 = arith.constant 0 : index
    %c0_6 = arith.constant 0 : index
    %5 = vector.load %arg6[%c0_4, %c0_5, %c0_6] : memref<2x33x128xf32, #tpu.memory_space<vmem>>, vector<1x33x128xf32>
    %6 = vector.shape_cast %5 : vector<1x33x128xf32> to vector<33x128xf32>
    %cst = arith.constant dense<0.000000e+00> : vector<33x128xf32>
    %7 = tpu.matmul %6, %3, %cst {dimension_numbers = #tpu.dot_dimension_numbers<[1], [0], [0], [1], [0, 0, 1, 1], [], []>} : vector<33x128xf32>, vector<128x128xf32>, vector<33x128xf32> -> vector<33x128xf32>
    %8 = vector.broadcast %4 : vector<1x128xf32> to vector<33x128xf32>
    %9 = arith.addf %7, %8 : vector<33x128xf32>
    %c0_7 = arith.constant 0 : index
    %c0_8 = arith.constant 0 : index
    %c0_9 = arith.constant 0 : index
    %10 = vector.load %arg5[%c0_7, %c0_8, %c0_9] : memref<2x33x128xf32, #tpu.memory_space<vmem>>, vector<1x33x128xf32>
    %11 = vector.shape_cast %10 : vector<1x33x128xf32> to vector<33x128xf32>
    %12 = vector.shape_cast %9 : vector<33x128xf32> to vector<1x33x128xf32>
    tpu.vector_store %arg5[%c0_7, %c0_8, %c0_9], %12 {strides = array<i32>} : memref<2x33x128xf32, #tpu.memory_space<vmem>>, vector<1x33x128xf32>,
    %c1 = arith.constant 1 : index
    %c0_10 = arith.constant 0 : index
    %c0_11 = arith.constant 0 : index
    %13 = vector.load %arg6[%c1, %c0_10, %c0_11] : memref<2x33x128xf32, #tpu.memory_space<vmem>>, vector<1x33x128xf32>
    %14 = vector.shape_cast %13 : vector<1x33x128xf32> to vector<33x128xf32>
    %cst_12 = arith.constant dense<0.000000e+00> : vector<33x128xf32>
    %15 = tpu.matmul %14, %3, %cst_12 {dimension_numbers = #tpu.dot_dimension_numbers<[1], [0], [0], [1], [0, 0, 1, 1], [], []>} : vector<33x128xf32>, vector<128x128xf32>, vector<33x128xf32> -> vector<33x128xf32>
    %16 = vector.broadcast %4 : vector<1x128xf32> to vector<33x128xf32>
    %17 = arith.addf %15, %16 : vector<33x128xf32>
    %c1_13 = arith.constant 1 : index
    %c0_14 = arith.constant 0 : index
    %c0_15 = arith.constant 0 : index
    %18 = vector.load %arg5[%c1_13, %c0_14, %c0_15] : memref<2x33x128xf32, #tpu.memory_space<vmem>>, vector<1x33x128xf32>
    %19 = vector.shape_cast %18 : vector<1x33x128xf32> to vector<33x128xf32>
    %20 = vector.shape_cast %17 : vector<33x128xf32> to vector<1x33x128xf32>
    tpu.vector_store %arg5[%c1_13, %c0_14, %c0_15], %20 {strides = array<i32>} : memref<2x33x128xf32, #tpu.memory_space<vmem>>, vector<1x33x128xf32>,
    return
  }
  func.func @transform_0(%arg0: i32, %arg1: i32) -> (i32, i32, i32) {
    %c0_i32 = arith.constant 0 : i32
    %c0_i32_0 = arith.constant 0 : i32
    %c0_i32_1 = arith.constant 0 : i32
    return %arg0, %c0_i32, %c0_i32_0 : i32, i32, i32
  }
  func.func @transform_1(%arg0: i32, %arg1: i32) -> (i32, i32) {
    %c0_i32 = arith.constant 0 : i32
    %c0_i32_0 = arith.constant 0 : i32
    return %c0_i32, %arg1 : i32, i32
  }
  func.func @transform_2(%arg0: i32, %arg1: i32) -> (i32, i32) {
    %c0_i32 = arith.constant 0 : i32
    %c0_i32_0 = arith.constant 0 : i32
    return %c0_i32, %arg1 : i32, i32
  }
  func.func @transform_3(%arg0: i32, %arg1: i32) -> (i32, i32, i32) {
    %c0_i32 = arith.constant 0 : i32
    %c0_i32_0 = arith.constant 0 : i32
    return %arg0, %c0_i32, %arg1 : i32, i32, i32
  }
}

</mosaic_0001>

<llo_original>
// kernel: tpu_custom_call.1
$region0: #{tpu_custom_call.1}
  #allocation0 [shape = 'u32[]', space=smem, size = 0x4, offset = 0x4, fixed_abs, tag = 'smem constant byte address 0x4 - core index']
  #allocation1 [shape = 'u32[144,128]{1,0:T(1,128)}', space=vmem, size = 0x12000, scoped, tag = 'internal scratch']
  #allocation2 [shape = 'f32[2,33,128]{2,1,0:T(8,128)}', space=vmem, size = 0xa000, scoped, tag = 'scratch operand']
  %s0 = inlined_call_operand.vmem [shape: f32[2,33,128], index: 0, kind: input, shape index: {}]
  %s1 = inlined_call_operand.vmem [shape: f32[128,128], index: 1, kind: input, shape index: {}]
  %s2 = inlined_call_operand.vmem [shape: f32[1,128], index: 2, kind: input, shape index: {}]
  %s3 = inlined_call_operand.vmem [shape: f32[2,33,128], index: 3, kind: output, shape index: {}]
  %s4 = sld [smem:[#allocation0]]
  $region26: #{tpu_custom_call.1} parent=0
    _
  %s6 = ssub.s32 1, %s4
  %s7 = scalar_select 0, %s6, %s4
  // Predicated region
  $region2: #{tpu_custom_call.1} parent=0 // pred_check
    _
  $region3: #{tpu_custom_call.1} parent=0 // pred_check_branch
    %9 = sbr.rel (0) target = $region5
  $region4: #{tpu_custom_call.1} parent=0 // pred_region
    _
  $region5: #{tpu_custom_call.1} parent=0 // pred_fallthru
    _
  // Predicated region
  $region6: #{tpu_custom_call.1} parent=0 // pred_check
    _
  $region7: #{tpu_custom_call.1} parent=0 // pred_check_branch
    %11 = sbr.rel (0) target = $region9
  $region8: #{tpu_custom_call.1} parent=0 // pred_region
    _
  $region9: #{tpu_custom_call.1} parent=0 // pred_fallthru
    _
  // Predicated region
  $region10: #{tpu_custom_call.1} parent=0 // pred_check
    _
  $region11: #{tpu_custom_call.1} parent=0 // pred_check_branch
    %13 = sbr.rel (0) target = $region13
  $region12: #{tpu_custom_call.1} parent=0 // pred_region
    _
  $region13: #{tpu_custom_call.1} parent=0 // pred_fallthru
    _
  %p14 = scmp.eq.s32.totalorder 0, 0
  // Predicated region
  $region14: #{tpu_custom_call.1} parent=0 // pred_check
    %p15 = pneg %p14
  $region15: #{tpu_custom_call.1} parent=0 // pred_check_branch
    %17 = sbr.rel (%p15) target = $region17
  $region16: #{tpu_custom_call.1} parent=0 // pred_region
    %v18 = vlaneseq
    %v19 = vshrl.u32 %v18, 7
    %v20 = vadd.s32 %v19, 8
    %v21 = vadd.s32 %v19, 16
    %v22 = vadd.s32 %v19, 24
    %v23 = vadd.s32 %v19, 32
    %v24 = vlaneseq
    %v25 = vand.u32 %v24, 127
    %vm26 = vcmp.ge.s32.totalorder %v19, 1
    %vm27 = vcmp.ge.s32.totalorder %v20, 1
    %vm28 = vcmp.ge.s32.totalorder %v21, 1
    %vm29 = vcmp.ge.s32.totalorder %v22, 1
    %vm30 = vcmp.ge.s32.totalorder %v23, 1
    %vm31 = vcmp.lt.s32.totalorder %v25, 42
    %v32 = vsel %vm26, 1, 0
    %v33 = vsel %vm27, 1, 0
    %v34 = vsel %vm28, 1, 0
    %v35 = vsel %vm29, 1, 0
    %v36 = vsel %vm30, 1, 0
    %vm37 = vcmp.eq.s32.totalorder %v32, 1
    %vm38 = vcmp.eq.s32.totalorder %v33, 1
    %vm39 = vcmp.eq.s32.totalorder %v34, 1
    %vm40 = vcmp.eq.s32.totalorder %v35, 1
    %vm41 = vcmp.eq.s32.totalorder %v36, 1
    %v42 = vsel %vm31, 1, 0
    %vm43 = vcmp.eq.s32.totalorder %v42, 1
    %vm44 = vmand %vm37, %vm43
    %vm45 = vmand %vm38, %vm43
    %vm46 = vmand %vm39, %vm43
    %vm47 = vmand %vm40, %vm43
    %vm48 = vmand %vm41, %vm43
    %vm49 = vcmp.ge.s32.totalorder %v25, 84
    %v50 = vsel %vm49, 1, 0
    %vm51 = vcmp.eq.s32.totalorder %v50, 1
    %vm52 = vmand %vm37, %vm51
    %vm53 = vmand %vm38, %vm51
    %vm54 = vmand %vm39, %vm51
    %vm55 = vmand %vm40, %vm51
    %vm56 = vmand %vm41, %vm51
    %vm57 = vcmp.lt.s32.totalorder %v25, 126
    %v58 = vsel %vm57, 1, 0
    %vm59 = vcmp.eq.s32.totalorder %v58, 1
    %vm60 = vmand %vm52, %vm59
    %vm61 = vmand %vm53, %vm59
    %vm62 = vmand %vm54, %vm59
    %vm63 = vmand %vm55, %vm59
    %vm64 = vmand %vm56, %vm59
    %v65 = vld [vmem:[%s0] sm:$0xff]
    %v66 = vld [vmem:[%s0 + $0x8] sm:$0xff]
    %v67 = vld [vmem:[%s0 + $0x10] sm:$0xff]
    %v68 = vld [vmem:[%s0 + $0x18] sm:$0xff]
    %v69 = vld [vmem:[%s0 + $0x20] sm:$0x1]
    %vm70 = vcmask 1040384
    %v71 = vsel %vm70, %v69, 0.0
    %v72 = vsel %vm70, 0.0, %v65
    %v73 = vsel %vm60, 0.0, %v65
    %v74 = vsel %vm61, %v72, %v66
    %v75 = vsel %vm62, %v66, %v67
    %v76 = vsel %vm63, %v67, %v68
    %v77 = vsel %vm64, %v68, %v69
    %v78 = vsel %vm44, %v66, %v73
    %v79 = vsel %vm45, %v67, %v74
    %v80 = vsel %vm46, %v68, %v75
    %v81 = vsel %vm47, %v71, %v76
    %v82 = vsel %vm48, 0.0, %v77
    %83 = vst [vmem:[#allocation2] sm:$0xff] %v78
    %84 = vst [vmem:[#allocation2 + $0x8] sm:$0xff] %v79
    %85 = vst [vmem:[#allocation2 + $0x10] sm:$0xff] %v80
    %86 = vst [vmem:[#allocation2 + $0x18] sm:$0xff] %v81
    %87 = vst [vmem:[#allocation2 + $0x20] sm:$0x1] %v82
    %s88 = scalar_lea.vmem %s0, 40
    %v89 = vld [vmem:[%s88] sm:$0xff]
    %v90 = vld [vmem:[%s88 + $0x8] sm:$0xff]
    %v91 = vld [vmem:[%s88 + $0x10] sm:$0xff]
    %v92 = vld [vmem:[%s88 + $0x18] sm:$0xff]
    %v93 = vld [vmem:[%s88 + $0x20] sm:$0x1]
    %v94 = vsel %vm70, %v93, 0.0
    %v95 = vsel %vm70, 0.0, %v89
    %v96 = vsel %vm60, 0.0, %v89
    %v97 = vsel %vm61, %v95, %v90
    %v98 = vsel %vm62, %v90, %v91
    %v99 = vsel %vm63, %v91, %v92
    %v100 = vsel %vm64, %v92, %v93
    %v101 = vsel %vm44, %v90, %v96
    %v102 = vsel %vm45, %v91, %v97
    %v103 = vsel %vm46, %v92, %v98
    %v104 = vsel %vm47, %v94, %v99
    %v105 = vsel %vm48, 0.0, %v100
    %s106 = scalar_lea.vmem [#allocation2], 40
    %107 = vst [vmem:[%s106] sm:$0xff] %v101
    %108 = vst [vmem:[%s106 + $0x8] sm:$0xff] %v102
    %109 = vst [vmem:[%s106 + $0x10] sm:$0xff] %v103
    %110 = vst [vmem:[%s106 + $0x18] sm:$0xff] %v104
    %111 = vst [vmem:[%s106 + $0x20] sm:$0x1] %v105
  $region17: #{tpu_custom_call.1} parent=0 // pred_fallthru
    _
  %v112 = vld [vmem:[%s1] sm:$0xff]
  %v113 = vld [vmem:[%s1 + $0x8] sm:$0xff]
  %v114 = vld [vmem:[%s1 + $0x10] sm:$0xff]
  %v115 = vld [vmem:[%s1 + $0x18] sm:$0xff]
  %v116 = vld [vmem:[%s1 + $0x20] sm:$0xff]
  %v117 = vld [vmem:[%s1 + $0x28] sm:$0xff]
  %v118 = vld [vmem:[%s1 + $0x30] sm:$0xff]
  %v119 = vld [vmem:[%s1 + $0x38] sm:$0xff]
  %v120 = vld [vmem:[%s1 + $0x40] sm:$0xff]
  %v121 = vld [vmem:[%s1 + $0x48] sm:$0xff]
  %v122 = vld [vmem:[%s1 + $0x50] sm:$0xff]
  %v123 = vld [vmem:[%s1 + $0x58] sm:$0xff]
  %v124 = vld [vmem:[%s1 + $0x60] sm:$0xff]
  %v125 = vld [vmem:[%s1 + $0x68] sm:$0xff]
  %v126 = vld [vmem:[%s1 + $0x70] sm:$0xff]
  %v127 = vld [vmem:[%s1 + $0x78] sm:$0xff]
  %v128 = vld [vmem:[%s2] sm:$0x1]
  %v129 = vld [vmem:[#allocation2] sm:$0xff]
  %v130 = vld [vmem:[#allocation2 + $0x8] sm:$0xff]
  %v131 = vld [vmem:[#allocation2 + $0x10] sm:$0xff]
  %v132 = vld [vmem:[#allocation2 + $0x18] sm:$0xff]
  %v133 = vld [vmem:[#allocation2 + $0x20] sm:$0x1]
  %v135 = vlaneseq
  %v136 = vshrl.u32 %v135, 7
  %v137 = vsub.s32 0, %v136
  %v138 = vrot.slane %v128, %v137
  %140 = vmatprep.subr.mxu0 0.0
  %141 = vmatpush1.msra.mxu0 %v127
  %142 = vmatprep.subr.mxu0 0.0
  %143 = vmatpush1.msra.mxu0 %v126
  %144 = vmatprep.subr.mxu0 0.0
  %145 = vmatpush1.msra.mxu0 %v125
  %146 = vmatprep.subr.mxu0 0.0
  %147 = vmatpush1.msra.mxu0 %v124
  %148 = vmatprep.subr.mxu0 0.0
  %149 = vmatpush1.msra.mxu0 %v123
  %150 = vmatprep.subr.mxu0 0.0
  %151 = vmatpush1.msra.mxu0 %v122
  %152 = vmatprep.subr.mxu0 0.0
  %153 = vmatpush1.msra.mxu0 %v121
  %154 = vmatprep.subr.mxu0 0.0
  %155 = vmatpush1.msra.mxu0 %v120
  %156 = vmatprep.subr.mxu0 0.0
  %157 = vmatpush1.msra.mxu0 %v119
  %158 = vmatprep.subr.mxu0 0.0
  %159 = vmatpush1.msra.mxu0 %v118
  %160 = vmatprep.subr.mxu0 0.0
  %161 = vmatpush1.msra.mxu0 %v117
  %162 = vmatprep.subr.mxu0 0.0
  %163 = vmatpush1.msra.mxu0 %v116
  %164 = vmatprep.subr.mxu0 0.0
  %165 = vmatpush1.msra.mxu0 %v115
  %166 = vmatprep.subr.mxu0 0.0
  %167 = vmatpush1.msra.mxu0 %v114
  %168 = vmatprep.subr.mxu0 0.0
  %169 = vmatpush1.msra.mxu0 %v113
  %170 = vmatprep.subr.mxu0 0.0
  %171 = vmatpush1.msra.mxu0 %v112
  %172 = vmatprep.subr.mxu0 0.0
  %173 = vmatpush2.msra.mxu0 0.0
  %174 = vmatprep.subr.mxu0 0.0
  %175 = vmatpush2.msra.mxu0 0.0
  %176 = vmatprep.subr.mxu0 0.0
  %177 = vmatpush2.msra.mxu0 0.0
  %178 = vmatprep.subr.mxu0 0.0
  %179 = vmatpush2.msra.mxu0 0.0
  %180 = vmatprep.subr.mxu0 0.0
  %181 = vmatpush2.msra.mxu0 0.0
  %182 = vmatprep.subr.mxu0 0.0
  %183 = vmatpush2.msra.mxu0 0.0
  %184 = vmatprep.subr.mxu0 0.0
  %185 = vmatpush2.msra.mxu0 0.0
  %186 = vmatprep.subr.mxu0 0.0
  %187 = vmatpush2.msra.mxu0 0.0
  %188 = vmatprep.subr.mxu0 0.0
  %189 = vmatpush2.msra.mxu0 0.0
  %190 = vmatprep.subr.mxu0 0.0
  %191 = vmatpush2.msra.mxu0 0.0
  %192 = vmatprep.subr.mxu0 0.0
  %193 = vmatpush2.msra.mxu0 0.0
  %194 = vmatprep.subr.mxu0 0.0
  %195 = vmatpush2.msra.mxu0 0.0
  %196 = vmatprep.subr.mxu0 0.0
  %197 = vmatpush2.msra.mxu0 0.0
  %198 = vmatprep.subr.mxu0 0.0
  %199 = vmatpush2.msra.mxu0 0.0
  %200 = vmatprep.subr.mxu0 0.0
  %201 = vmatpush2.msra.mxu0 0.0
  %202 = vmatprep.subr.mxu0 0.0
  %203 = vmatpush2.msra.mxu0 0.0
  %204 = vmatprep.mubr.f32.mxu0 0.0
  %205 = vmatmul.mubr.f32.gmra.mxu0 %v129
  %v206 = vpop.f32.mrf.mxu0
  %v207 = vadd.f32 %v138, %v206
  %v208 = vpop.f32.mrf.mxu0
  %209 = vmatprep.mubr.f32.mxu0 0.0
  %210 = vmatmul.mubr.f32.gmra.mxu0 %v130
  %v211 = vpop.f32.mrf.mxu0
  %v212 = vadd.f32 %v138, %v211
  %v213 = vpop.f32.mrf.mxu0
  %214 = vmatprep.mubr.f32.mxu0 0.0
  %215 = vmatmul.mubr.f32.gmra.mxu0 %v131
  %v216 = vpop.f32.mrf.mxu0
  %v217 = vadd.f32 %v138, %v216
  %v218 = vpop.f32.mrf.mxu0
  %219 = vmatprep.mubr.f32.mxu0 0.0
  %220 = vmatmul.mubr.f32.gmra.mxu0 %v132
  %v221 = vpop.f32.mrf.mxu0
  %v222 = vadd.f32 %v138, %v221
  %v223 = vpop.f32.mrf.mxu0
  %224 = vmatprep.mubr.f32.mxu0 0.0
  %225 = vmatmul.mubr.f32.gmra.mxu0 %v133
  %v226 = vpop.f32.mrf.mxu0
  %v227 = vadd.f32 %v138, %v226
  %v228 = vpop.f32.mrf.mxu0
  %229 = vdwg.mxu0
  %230 = vst [vmem:[%s3] sm:$0xff] %v207
  %231 = vst [vmem:[%s3 + $0x8] sm:$0xff] %v212
  %232 = vst [vmem:[%s3 + $0x10] sm:$0xff] %v217
  %233 = vst [vmem:[%s3 + $0x18] sm:$0xff] %v222
  %234 = vst [vmem:[%s3 + $0x20] sm:$0x1] %v227
  %s235 = scalar_lea.vmem [#allocation2], 40
  %v236 = vld [vmem:[%s235] sm:$0xff]
  %v237 = vld [vmem:[%s235 + $0x8] sm:$0xff]
  %v238 = vld [vmem:[%s235 + $0x10] sm:$0xff]
  %v239 = vld [vmem:[%s235 + $0x18] sm:$0xff]
  %v240 = vld [vmem:[%s235 + $0x20] sm:$0x1]
  %241 = vmatprep.subr.mxu0 0.0
  %242 = vmatpush1.msra.mxu0 %v127
  %243 = vmatprep.subr.mxu0 0.0
  %244 = vmatpush1.msra.mxu0 %v126
  %245 = vmatprep.subr.mxu0 0.0
  %246 = vmatpush1.msra.mxu0 %v125
  %247 = vmatprep.subr.mxu0 0.0
  %248 = vmatpush1.msra.mxu0 %v124
  %249 = vmatprep.subr.mxu0 0.0
  %250 = vmatpush1.msra.mxu0 %v123
  %251 = vmatprep.subr.mxu0 0.0
  %252 = vmatpush1.msra.mxu0 %v122
  %253 = vmatprep.subr.mxu0 0.0
  %254 = vmatpush1.msra.mxu0 %v121
  %255 = vmatprep.subr.mxu0 0.0
  %256 = vmatpush1.msra.mxu0 %v120
  %257 = vmatprep.subr.mxu0 0.0
  %258 = vmatpush1.msra.mxu0 %v119
  %259 = vmatprep.subr.mxu0 0.0
  %260 = vmatpush1.msra.mxu0 %v118
  %261 = vmatprep.subr.mxu0 0.0
  %262 = vmatpush1.msra.mxu0 %v117
  %263 = vmatprep.subr.mxu0 0.0
  %264 = vmatpush1.msra.mxu0 %v116
  %265 = vmatprep.subr.mxu0 0.0
  %266 = vmatpush1.msra.mxu0 %v115
  %267 = vmatprep.subr.mxu0 0.0
  %268 = vmatpush1.msra.mxu0 %v114
  %269 = vmatprep.subr.mxu0 0.0
  %270 = vmatpush1.msra.mxu0 %v113
  %271 = vmatprep.subr.mxu0 0.0
  %272 = vmatpush1.msra.mxu0 %v112
  %273 = vmatprep.subr.mxu0 0.0
  %274 = vmatpush2.msra.mxu0 0.0
  %275 = vmatprep.subr.mxu0 0.0
  %276 = vmatpush2.msra.mxu0 0.0
  %277 = vmatprep.subr.mxu0 0.0
  %278 = vmatpush2.msra.mxu0 0.0
  %279 = vmatprep.subr.mxu0 0.0
  %280 = vmatpush2.msra.mxu0 0.0
  %281 = vmatprep.subr.mxu0 0.0
  %282 = vmatpush2.msra.mxu0 0.0
  %283 = vmatprep.subr.mxu0 0.0
  %284 = vmatpush2.msra.mxu0 0.0
  %285 = vmatprep.subr.mxu0 0.0
  %286 = vmatpush2.msra.mxu0 0.0
  %287 = vmatprep.subr.mxu0 0.0
  %288 = vmatpush2.msra.mxu0 0.0
  %289 = vmatprep.subr.mxu0 0.0
  %290 = vmatpush2.msra.mxu0 0.0
  %291 = vmatprep.subr.mxu0 0.0
  %292 = vmatpush2.msra.mxu0 0.0
  %293 = vmatprep.subr.mxu0 0.0
  %294 = vmatpush2.msra.mxu0 0.0
  %295 = vmatprep.subr.mxu0 0.0
  %296 = vmatpush2.msra.mxu0 0.0
  %297 = vmatprep.subr.mxu0 0.0
  %298 = vmatpush2.msra.mxu0 0.0
  %299 = vmatprep.subr.mxu0 0.0
  %300 = vmatpush2.msra.mxu0 0.0
  %301 = vmatprep.subr.mxu0 0.0
  %302 = vmatpush2.msra.mxu0 0.0
  %303 = vmatprep.subr.mxu0 0.0
  %304 = vmatpush2.msra.mxu0 0.0
  %305 = vmatprep.mubr.f32.mxu0 0.0
  %306 = vmatmul.mubr.f32.gmra.mxu0 %v236
  %v307 = vpop.f32.mrf.mxu0
  %v308 = vadd.f32 %v138, %v307
  %v309 = vpop.f32.mrf.mxu0
  %310 = vmatprep.mubr.f32.mxu0 0.0
  %311 = vmatmul.mubr.f32.gmra.mxu0 %v237
  %v312 = vpop.f32.mrf.mxu0
  %v313 = vadd.f32 %v138, %v312
  %v314 = vpop.f32.mrf.mxu0
  %315 = vmatprep.mubr.f32.mxu0 0.0
  %316 = vmatmul.mubr.f32.gmra.mxu0 %v238
  %v317 = vpop.f32.mrf.mxu0
  %v318 = vadd.f32 %v138, %v317
  %v319 = vpop.f32.mrf.mxu0
  %320 = vmatprep.mubr.f32.mxu0 0.0
  %321 = vmatmul.mubr.f32.gmra.mxu0 %v239
  %v322 = vpop.f32.mrf.mxu0
  %v323 = vadd.f32 %v138, %v322
  %v324 = vpop.f32.mrf.mxu0
  %325 = vmatprep.mubr.f32.mxu0 0.0
  %326 = vmatmul.mubr.f32.gmra.mxu0 %v240
  %v327 = vpop.f32.mrf.mxu0
  %v328 = vadd.f32 %v138, %v327
  %v329 = vpop.f32.mrf.mxu0
  %330 = vdwg.mxu0
  %s331 = scalar_lea.vmem %s3, 40
  %332 = vst [vmem:[%s331] sm:$0xff] %v308
  %333 = vst [vmem:[%s331 + $0x8] sm:$0xff] %v313
  %334 = vst [vmem:[%s331 + $0x10] sm:$0xff] %v318
  %335 = vst [vmem:[%s331 + $0x18] sm:$0xff] %v323
  %336 = vst [vmem:[%s331 + $0x20] sm:$0x1] %v328
  // Predicated region
  $region18: #{tpu_custom_call.1} parent=0 // pred_check
    _
  $region19: #{tpu_custom_call.1} parent=0 // pred_check_branch
    %338 = sbr.rel (0) target = $region21
  $region20: #{tpu_custom_call.1} parent=0 // pred_region
    _
  $region21: #{tpu_custom_call.1} parent=0 // pred_fallthru
    _
  // Predicated region
  $region22: #{tpu_custom_call.1} parent=0 // pred_check
    _
  $region23: #{tpu_custom_call.1} parent=0 // pred_check_branch
    %340 = sbr.rel (0) target = $region25
  $region24: #{tpu_custom_call.1} parent=0 // pred_region
    _
  $region25: #{tpu_custom_call.1} parent=0 // pred_fallthru
    _

</llo_original>
